<compile_context>
chip_gen: v5e
topology: v5e:2x2
jax: 0.10.0
libtpu: 0.0.40
codegen_flags: <defaults>
</compile_context>

<pallas_src>
import functools

import jax
import jax.numpy as jnp
from jax.experimental import pallas as pl
from jax.experimental.pallas import tpu as pltpu


def _round_up(v, m):
    return ((v + m - 1) // m) * m


def _pick_tile(n_pad, cap=512):
    for t in (cap, 256, 128):
        if n_pad % t == 0:
            return t
    return 128


def _pad2(a, shape, dtype=jnp.float32):
    return jnp.zeros(shape, dtype).at[: a.shape[0], : a.shape[1]].set(a.astype(dtype))


def build_mean_adj(edge_index, num_nodes, padded_nodes=None):
    """Dense mean-aggregation operator: A[i, j] = #edges(j->i) / in_degree(i)."""
    padded_nodes = num_nodes if padded_nodes is None else padded_nodes
    src = edge_index[0]
    dst = edge_index[1]
    a = jnp.zeros((padded_nodes, padded_nodes), jnp.float32).at[dst, src].add(1.0)
    deg = jnp.sum(a, axis=1, keepdims=True)
    return a / jnp.maximum(deg, 1.0)


# ---- layer 1 kernel: h = relu(A@x @ W1l + x @ W1r + b1),  hw = h @ W2l ----------


def _sage_layer1_kernel(a_ref, xk_ref, xi_ref, w1l_ref, w1r_ref, b1_ref, w2l_ref,
                        h_ref, hw_ref, acc_ref):
    k = pl.program_id(1)

    @pl.when(k == 0)
    def _():
        acc_ref[...] = jnp.zeros_like(acc_ref)

    # mean aggregation: accumulate A[i, k] @ x[k]   (bf16 MXU, f32 accumulate)
    acc_ref[...] += jnp.dot(a_ref[...], xk_ref[...],
                            preferred_element_type=jnp.float32)

    @pl.when(k == pl.num_programs(1) - 1)
    def _():
        agg = acc_ref[...]
        h = (jnp.dot(agg, w1l_ref[...], preferred_element_type=jnp.float32)
             + jnp.dot(xi_ref[...].astype(jnp.float32), w1r_ref[...],
                       preferred_element_type=jnp.float32)
             + b1_ref[...])
        h = jnp.maximum(h, 0.0)          # ReLU; dropout (eval mode) -> identity
        h_ref[...] = h.astype(h_ref.dtype)
        # Fold conv2's lin_l here so layer 2 aggregates A @ (h @ W2_l), i.e. over
        # the out-channel width instead of the hidden width (reassociation).
        hw_ref[...] = jnp.dot(h, w2l_ref[...],
                              preferred_element_type=jnp.float32).astype(hw_ref.dtype)


# ---- layer 2 kernel: out = softmax(A @ (h@W2l) + h @ W2r + b2, dim=1) -----------


def _sage_layer2_kernel(a_ref, hwk_ref, hi_ref, w2r_ref, b2_ref,
                        o_ref, acc_ref, *, out_channels):
    k = pl.program_id(1)

    @pl.when(k == 0)
    def _():
        acc_ref[...] = jnp.zeros_like(acc_ref)

    acc_ref[...] += jnp.dot(a_ref[...], hwk_ref[...],
                            preferred_element_type=jnp.float32)

    @pl.when(k == pl.num_programs(1) - 1)
    def _():
        z = (acc_ref[...]
             + jnp.dot(hi_ref[...].astype(jnp.float32), w2r_ref[...],
                       preferred_element_type=jnp.float32)
             + b2_ref[...])
        # mask zero-padded lanes out of the row softmax
        col = jax.lax.broadcasted_iota(jnp.int32, z.shape, 1)
        z = jnp.where(col < out_channels, z, -jnp.inf)
        z = z - jnp.max(z, axis=1, keepdims=True)
        e = jnp.exp(z)
        o_ref[...] = e * pl.reciprocal(jnp.sum(e, axis=1, keepdims=True),
                                       approx=True)


# ---- wrapper --------------------------------------------------------------------


def graphsage_forward(x, edge_index, params):
    n, cin = x.shape
    hidden = params["w1_l"].shape[1]
    out_ch = params["w2_l"].shape[1]

    n_pad = _round_up(n, 128)
    c_pad = _round_up(cin, 128)
    h_pad = _round_up(hidden, 128)
    o_pad = _round_up(out_ch, 128)
    tm = _pick_tile(n_pad)               # row tile    ("parallel" axis)
    tk = _pick_tile(n_pad)               # reduce tile ("arbitrary" axis)
    grid = (n_pad // tm, n_pad // tk)

    # Dense normalized adjacency (mean aggregation), bf16 for the dominant operand.
    a = build_mean_adj(edge_index, n, n_pad).astype(jnp.bfloat16)
    xb = _pad2(x, (n_pad, c_pad), jnp.bfloat16)

    # Zero-pad feature widths to 128-lane multiples (lane-dense blocks everywhere).
    w1l = _pad2(params["w1_l"], (c_pad, h_pad))
    w1r = _pad2(params["w1_r"], (c_pad, h_pad))
    b1 = _pad2(params["b1"], (1, h_pad))
    w2l = _pad2(params["w2_l"], (h_pad, o_pad))
    w2r = _pad2(params["w2_r"], (h_pad, o_pad))
    b2 = _pad2(params["b2"], (1, o_pad))

    cparams = pltpu.CompilerParams(
        dimension_semantics=("parallel", "arbitrary"),
        vmem_limit_bytes=32 * 1024 * 1024,
    )

    h, hw = pl.pallas_call(
        _sage_layer1_kernel,
        out_shape=(jax.ShapeDtypeStruct((n_pad, h_pad), jnp.bfloat16),
                   jax.ShapeDtypeStruct((n_pad, o_pad), jnp.bfloat16)),
        grid_spec=pltpu.PrefetchScalarGridSpec(
            num_scalar_prefetch=0,
            grid=grid,
            in_specs=[
                pl.BlockSpec((tm, tk), lambda i, k: (i, k)),        # A tile
                pl.BlockSpec((tk, c_pad), lambda i, k: (k, 0)),     # x (neighbor rows)
                pl.BlockSpec((tm, c_pad), lambda i, k: (i, 0)),     # x (root rows)
                pl.BlockSpec((c_pad, h_pad), lambda i, k: (0, 0)),  # W1_l
                pl.BlockSpec((c_pad, h_pad), lambda i, k: (0, 0)),  # W1_r
                pl.BlockSpec((1, h_pad), lambda i, k: (0, 0)),      # b1
                pl.BlockSpec((h_pad, o_pad), lambda i, k: (0, 0)),  # W2_l (fused in)
            ],
            out_specs=[pl.BlockSpec((tm, h_pad), lambda i, k: (i, 0)),
                       pl.BlockSpec((tm, o_pad), lambda i, k: (i, 0))],
            scratch_shapes=[pltpu.VMEM((tm, c_pad), jnp.float32)],
        ),
        compiler_params=cparams,
    )(a, xb, xb, w1l, w1r, b1, w2l)

    out_padded = pl.pallas_call(
        functools.partial(_sage_layer2_kernel, out_channels=out_ch),
        out_shape=jax.ShapeDtypeStruct((n_pad, o_pad), jnp.float32),
        grid_spec=pltpu.PrefetchScalarGridSpec(
            num_scalar_prefetch=0,
            grid=grid,
            in_specs=[
                pl.BlockSpec((tm, tk), lambda i, k: (i, k)),        # A tile
                pl.BlockSpec((tk, o_pad), lambda i, k: (k, 0)),     # (h @ W2_l) rows
                pl.BlockSpec((tm, h_pad), lambda i, k: (i, 0)),     # h (root rows)
                pl.BlockSpec((h_pad, o_pad), lambda i, k: (0, 0)),  # W2_r
                pl.BlockSpec((1, o_pad), lambda i, k: (0, 0)),      # b2
            ],
            out_specs=pl.BlockSpec((tm, o_pad), lambda i, k: (i, 0)),
            scratch_shapes=[pltpu.VMEM((tm, o_pad), jnp.float32)],
        ),
        compiler_params=cparams,
    )(a, hw, h, w2r, b2)

    return out_padded[:n, :out_ch]


def init_params(key, in_channels, hidden_channels, out_channels):
    ks = jax.random.split(key, 6)

    def glorot(k, shape):
        fan_in, fan_out = shape
        lim = (6.0 / (fan_in + fan_out)) ** 0.5
        return jax.random.uniform(k, shape, jnp.float32, -lim, lim)

    return {
        # lin_l applied to aggregated neighbors (has bias); lin_r applied to root x.
        "w1_l": glorot(ks[0], (in_channels, hidden_channels)),
        "w1_r": glorot(ks[1], (in_channels, hidden_channels)),
        "b1":   jnp.zeros((1, hidden_channels), jnp.float32),
        "w2_l": glorot(ks[2], (hidden_channels, out_channels)),
        "w2_r": glorot(ks[3], (hidden_channels, out_channels)),
        "b2":   jnp.zeros((1, out_channels), jnp.float32),
    }


def reference_forward(x, edge_index, params):
    """Pure-JAX f32 reference of the same forward pass."""
    n = x.shape[0]
    a = build_mean_adj(edge_index, n)
    h = jnp.maximum(a @ x @ params["w1_l"] + x @ params["w1_r"] + params["b1"], 0.0)
    z = a @ h @ params["w2_l"] + h @ params["w2_r"] + params["b2"]
    return jax.nn.softmax(z, axis=1)


if __name__ == "__main__":
    key = jax.random.PRNGKey(0)
    k_x, k_e, k_p = jax.random.split(key, 3)

    num_nodes = 16
    in_channels = 8
    hidden_channels = 32
    out_channels = 8
    num_edges = 48

    x = jax.random.normal(k_x, (num_nodes, in_channels), jnp.float32)
    edge_index = jax.random.randint(k_e, (2, num_edges), 0, num_nodes, jnp.int32)
    params = init_params(k_p, in_channels, hidden_channels, out_channels)

    out = graphsage_forward(x, edge_index, params)
    out = jax.block_until_ready(out)

    assert out.shape == (num_nodes, out_channels)
    # softmax rows sum to ~1 (approx reciprocal + bf16 inputs -> loose tolerance)
    assert jnp.allclose(jnp.sum(out, axis=1), 1.0, atol=1e-2)
    # matches f32 reference within bf16-level tolerance
    ref = reference_forward(x, edge_index, params)
    assert float(jnp.max(jnp.abs(out - ref))) < 5e-2
    print("KERNEL_OK")
</pallas_src>

<mosaic_0001>
module attributes {stable_mosaic.version = 11 : i64} {
  func.func @_sage_layer1_kernel(%arg0: i32, %arg1: i32, %arg2: memref<128x128xbf16, #tpu.memory_space<vmem>>, %arg3: memref<128x128xbf16, #tpu.memory_space<vmem>>, %arg4: memref<128x128xbf16, #tpu.memory_space<vmem>>, %arg5: memref<128x128xf32, #tpu.memory_space<vmem>>, %arg6: memref<128x128xf32, #tpu.memory_space<vmem>>, %arg7: memref<1x128xf32, #tpu.memory_space<vmem>>, %arg8: memref<128x128xf32, #tpu.memory_space<vmem>>, %arg9: memref<128x128xbf16, #tpu.memory_space<vmem>>, %arg10: memref<128x128xbf16, #tpu.memory_space<vmem>>, %arg11: memref<128x128xf32, #tpu.memory_space<vmem>>) attributes {dimension_semantics = [#tpu.dimension_semantics<parallel>, #tpu.dimension_semantics<arbitrary>], iteration_bounds = array<i64: 1, 1>, scalar_prefetch = 0 : i64, scratch_operands = 1 : i64, tpu.core_type = #tpu.core_type<tc>, window_params = [{transform_indices = @transform_0, window_bounds = array<i64: 128, 128>}, {transform_indices = @transform_1, window_bounds = array<i64: 128, 128>}, {transform_indices = @transform_2, window_bounds = array<i64: 128, 128>}, {pipeline_mode = #tpu.pipeline_mode<synchronous>, transform_indices = @transform_3, window_bounds = array<i64: 128, 128>}, {pipeline_mode = #tpu.pipeline_mode<synchronous>, transform_indices = @transform_4, window_bounds = array<i64: 128, 128>}, {pipeline_mode = #tpu.pipeline_mode<synchronous>, transform_indices = @transform_5, window_bounds = array<i64: 1, 128>}, {pipeline_mode = #tpu.pipeline_mode<synchronous>, transform_indices = @transform_6, window_bounds = array<i64: 128, 128>}, {transform_indices = @transform_7, window_bounds = array<i64: 128, 128>}, {transform_indices = @transform_8, window_bounds = array<i64: 128, 128>}]} {
    %c0_i32 = arith.constant 0 : i32
    %0 = arith.cmpi eq, %arg1, %c0_i32 : i32
    %1 = arith.extui %0 : i1 to i32
    %c0_i32_0 = arith.constant 0 : i32
    %2 = arith.cmpi ne, %1, %c0_i32_0 : i32
    scf.if %2 {
      %cst_10 = arith.constant 0.000000e+00 : f32
      %12 = vector.broadcast %cst_10 : f32 to vector<128x128xf32>
      %c0_11 = arith.constant 0 : index
      %c0_12 = arith.constant 0 : index
      %13 = vector.load %arg11[%c0_11, %c0_12] : memref<128x128xf32, #tpu.memory_space<vmem>>, vector<128x128xf32>
      tpu.vector_store %arg11[%c0_11, %c0_12], %12 {strides = array<i32>} : memref<128x128xf32, #tpu.memory_space<vmem>>, vector<128x128xf32>,
    } else {
    }
    %c0 = arith.constant 0 : index
    %c0_1 = arith.constant 0 : index
    %3 = vector.load %arg11[%c0, %c0_1] : memref<128x128xf32, #tpu.memory_space<vmem>>, vector<128x128xf32>
    %c0_2 = arith.constant 0 : index
    %c0_3 = arith.constant 0 : index
    %4 = vector.load %arg2[%c0_2, %c0_3] : memref<128x128xbf16, #tpu.memory_space<vmem>>, vector<128x128xbf16>
    %c0_4 = arith.constant 0 : index
    %c0_5 = arith.constant 0 : index
    %5 = vector.load %arg3[%c0_4, %c0_5] : memref<128x128xbf16, #tpu.memory_space<vmem>>, vector<128x128xbf16>
    %cst = arith.constant dense<0.000000e+00> : vector<128x128xf32>
    %6 = tpu.matmul %4, %5, %cst {dimension_numbers = #tpu.dot_dimension_numbers<[1], [0], [0], [1], [0, 0, 1, 1], [], []>} : vector<128x128xbf16>, vector<128x128xbf16>, vector<128x128xf32> -> vector<128x128xf32>
    %7 = arith.addf %3, %6 : vector<128x128xf32>
    %c0_6 = arith.constant 0 : index
    %c0_7 = arith.constant 0 : index
    %8 = vector.load %arg11[%c0_6, %c0_7] : memref<128x128xf32, #tpu.memory_space<vmem>>, vector<128x128xf32>
    tpu.vector_store %arg11[%c0_6, %c0_7], %7 {strides = array<i32>} : memref<128x128xf32, #tpu.memory_space<vmem>>, vector<128x128xf32>,
    %c0_i32_8 = arith.constant 0 : i32
    %9 = arith.cmpi eq, %arg1, %c0_i32_8 : i32
    %10 = arith.extui %9 : i1 to i32
    %c0_i32_9 = arith.constant 0 : i32
    %11 = arith.cmpi ne, %10, %c0_i32_9 : i32
    scf.if %11 {
      %c0_10 = arith.constant 0 : index
      %c0_11 = arith.constant 0 : index
      %12 = vector.load %arg11[%c0_10, %c0_11] : memref<128x128xf32, #tpu.memory_space<vmem>>, vector<128x128xf32>
      %c0_12 = arith.constant 0 : index
      %c0_13 = arith.constant 0 : index
      %13 = vector.load %arg5[%c0_12, %c0_13] : memref<128x128xf32, #tpu.memory_space<vmem>>, vector<128x128xf32>
      %cst_14 = arith.constant dense<0.000000e+00> : vector<128x128xf32>
      %14 = tpu.matmul %12, %13, %cst_14 {dimension_numbers = #tpu.dot_dimension_numbers<[1], [0], [0], [1], [0, 0, 1, 1], [], []>} : vector<128x128xf32>, vector<128x128xf32>, vector<128x128xf32> -> vector<128x128xf32>
      %c0_15 = arith.constant 0 : index
      %c0_16 = arith.constant 0 : index
      %15 = vector.load %arg4[%c0_15, %c0_16] : memref<128x128xbf16, #tpu.memory_space<vmem>>, vector<128x128xbf16>
      %16 = arith.extf %15 : vector<128x128xbf16> to vector<128x128xf32>
      %c0_17 = arith.constant 0 : index
      %c0_18 = arith.constant 0 : index
      %17 = vector.load %arg6[%c0_17, %c0_18] : memref<128x128xf32, #tpu.memory_space<vmem>>, vector<128x128xf32>
      %cst_19 = arith.constant dense<0.000000e+00> : vector<128x128xf32>
      %18 = tpu.matmul %16, %17, %cst_19 {dimension_numbers = #tpu.dot_dimension_numbers<[1], [0], [0], [1], [0, 0, 1, 1], [], []>} : vector<128x128xf32>, vector<128x128xf32>, vector<128x128xf32> -> vector<128x128xf32>
      %19 = arith.addf %14, %18 : vector<128x128xf32>
      %c0_20 = arith.constant 0 : index
      %c0_21 = arith.constant 0 : index
      %20 = vector.load %arg7[%c0_20, %c0_21] : memref<1x128xf32, #tpu.memory_space<vmem>>, vector<1x128xf32>
      %21 = vector.broadcast %20 : vector<1x128xf32> to vector<128x128xf32>
      %22 = arith.addf %19, %21 : vector<128x128xf32>
      %cst_22 = arith.constant 0.000000e+00 : f32
      %23 = vector.broadcast %cst_22 : f32 to vector<128x128xf32>
      %24 = arith.maximumf %22, %23 : vector<128x128xf32>
      %25 = arith.truncf %24 : vector<128x128xf32> to vector<128x128xbf16>
      %c0_23 = arith.constant 0 : index
      %c0_24 = arith.constant 0 : index
      %26 = vector.load %arg9[%c0_23, %c0_24] : memref<128x128xbf16, #tpu.memory_space<vmem>>, vector<128x128xbf16>
      tpu.vector_store %arg9[%c0_23, %c0_24], %25 {strides = array<i32>} : memref<128x128xbf16, #tpu.memory_space<vmem>>, vector<128x128xbf16>,
      %c0_25 = arith.constant 0 : index
      %c0_26 = arith.constant 0 : index
      %27 = vector.load %arg8[%c0_25, %c0_26] : memref<128x128xf32, #tpu.memory_space<vmem>>, vector<128x128xf32>
      %cst_27 = arith.constant dense<0.000000e+00> : vector<128x128xf32>
      %28 = tpu.matmul %24, %27, %cst_27 {dimension_numbers = #tpu.dot_dimension_numbers<[1], [0], [0], [1], [0, 0, 1, 1], [], []>} : vector<128x128xf32>, vector<128x128xf32>, vector<128x128xf32> -> vector<128x128xf32>
      %29 = arith.truncf %28 : vector<128x128xf32> to vector<128x128xbf16>
      %c0_28 = arith.constant 0 : index
      %c0_29 = arith.constant 0 : index
      %30 = vector.load %arg10[%c0_28, %c0_29] : memref<128x128xbf16, #tpu.memory_space<vmem>>, vector<128x128xbf16>
      tpu.vector_store %arg10[%c0_28, %c0_29], %29 {strides = array<i32>} : memref<128x128xbf16, #tpu.memory_space<vmem>>, vector<128x128xbf16>,
    } else {
    }
    return
  }
  func.func @transform_0(%arg0: i32, %arg1: i32) -> (i32, i32) {
    %c0_i32 = arith.constant 0 : i32
    return %arg0, %arg1 : i32, i32
  }
  func.func @transform_1(%arg0: i32, %arg1: i32) -> (i32, i32) {
    %c0_i32 = arith.constant 0 : i32
    %c0_i32_0 = arith.constant 0 : i32
    return %arg1, %c0_i32 : i32, i32
  }
  func.func @transform_2(%arg0: i32, %arg1: i32) -> (i32, i32) {
    %c0_i32 = arith.constant 0 : i32
    %c0_i32_0 = arith.constant 0 : i32
    return %arg0, %c0_i32 : i32, i32
  }
  func.func @transform_3(%arg0: i32, %arg1: i32) -> (i32, i32) {
    %c0_i32 = arith.constant 0 : i32
    %c0_i32_0 = arith.constant 0 : i32
    %c0_i32_1 = arith.constant 0 : i32
    return %c0_i32, %c0_i32_0 : i32, i32
  }
  func.func @transform_4(%arg0: i32, %arg1: i32) -> (i32, i32) {
    %c0_i32 = arith.constant 0 : i32
    %c0_i32_0 = arith.constant 0 : i32
    %c0_i32_1 = arith.constant 0 : i32
    return %c0_i32, %c0_i32_0 : i32, i32
  }
  func.func @transform_5(%arg0: i32, %arg1: i32) -> (i32, i32) {
    %c0_i32 = arith.constant 0 : i32
    %c0_i32_0 = arith.constant 0 : i32
    %c0_i32_1 = arith.constant 0 : i32
    return %c0_i32, %c0_i32_0 : i32, i32
  }
  func.func @transform_6(%arg0: i32, %arg1: i32) -> (i32, i32) {
    %c0_i32 = arith.constant 0 : i32
    %c0_i32_0 = arith.constant 0 : i32
    %c0_i32_1 = arith.constant 0 : i32
    return %c0_i32, %c0_i32_0 : i32, i32
  }
  func.func @transform_7(%arg0: i32, %arg1: i32) -> (i32, i32) {
    %c0_i32 = arith.constant 0 : i32
    %c0_i32_0 = arith.constant 0 : i32
    return %arg0, %c0_i32 : i32, i32
  }
  func.func @transform_8(%arg0: i32, %arg1: i32) -> (i32, i32) {
    %c0_i32 = arith.constant 0 : i32
    %c0_i32_0 = arith.constant 0 : i32
    return %arg0, %c0_i32 : i32, i32
  }
}

</mosaic_0001>

<llo_original>
// kernel: tpu_custom_call.1
$region0: #{tpu_custom_call.1}
  #allocation0 [shape = 'u32[]', space=smem, size = 0x4, offset = 0x4, fixed_abs, tag = 'smem constant byte address 0x4 - core index']
  #allocation1 [shape = 'u32[72,128]{1,0:T(1,128)}', space=vmem, size = 0x9000, scoped, tag = 'internal scratch']
  #allocation2 [shape = 'f32[128,128]{1,0:T(8,128)}', space=vmem, size = 0x10000, scoped, tag = 'scratch operand']
  %s0 = inlined_call_operand.hbm [shape: bf16[128,128], index: 0, kind: input, shape index: {}]
  %s1 = inlined_call_operand.hbm [shape: bf16[128,128], index: 1, kind: input, shape index: {}]
  %s2 = inlined_call_operand.hbm [shape: bf16[128,128], index: 2, kind: input, shape index: {}]
  %s3 = inlined_call_operand.hbm [shape: f32[128,128], index: 3, kind: input, shape index: {}]
  %s4 = inlined_call_operand.hbm [shape: f32[128,128], index: 4, kind: input, shape index: {}]
  %s5 = inlined_call_operand.vmem [shape: f32[1,128], index: 5, kind: input, shape index: {}]
  %s6 = inlined_call_operand.hbm [shape: f32[128,128], index: 6, kind: input, shape index: {}]
  %s7 = inlined_call_operand.hbm [shape: bf16[128,128], index: 7, kind: output, shape index: {0}]
  %s8 = inlined_call_operand.hbm [shape: bf16[128,128], index: 8, kind: output, shape index: {1}]
  %9 = xla_tuple %s7, %s8
  %s10 = sld [smem:[#allocation0]]
  $region78: #{tpu_custom_call.1} parent=0
    _
  %s12 = ssub.s32 1, %s10
  %s13 = scalar_select 0, %s12, %s10
  $region1: #{tpu_custom_call.1} parent=0
    #allocation3 [shape = 'u8[32768]{0}', space=vmem, size = 0x8000, scoped, tag = 'input window, operand 0, single buffered']
    #allocation4 [shape = 's32[1]{0}', space=sflag, size = 0x4, scoped, tag = 'scoped memory for tpu_custom_call.1']
    #allocation5 [shape = 's32[1]{0}', space=sflag, size = 0x4, scoped, tag = 'scoped memory for tpu_custom_call.1']
    #allocation6 [shape = 'u8[32768]{0}', space=vmem, size = 0x8000, scoped, tag = 'input window, operand 1, single buffered']
    #allocation7 [shape = 's32[1]{0}', space=sflag, size = 0x4, scoped, tag = 'scoped memory for tpu_custom_call.1']
    #allocation8 [shape = 'u8[32768]{0}', space=vmem, size = 0x8000, scoped, tag = 'input window, operand 2, single buffered']
    #allocation9 [shape = 'u8[65536]{0}', space=vmem, size = 0x10000, scoped, tag = 'input window, operand 3, single buffered']
    #allocation10 [shape = 's32[1]{0}', space=sflag, size = 0x4, scoped, tag = 'scoped memory for tpu_custom_call.1']
    #allocation11 [shape = 'u8[65536]{0}', space=vmem, size = 0x10000, scoped, tag = 'input window, operand 4, single buffered']
    #allocation12 [shape = 'u8[65536]{0}', space=vmem, size = 0x10000, scoped, tag = 'input window, operand 6, single buffered']
    #allocation13 [shape = 's32[1]{0}', space=sflag, size = 0x4, scoped, tag = 'scoped memory for tpu_custom_call.1']
    #allocation14 [shape = 'u8[32768]{0}', space=vmem, size = 0x8000, scoped, tag = 'output window, operand 0, single buffered']
    #allocation15 [shape = 'u8[32768]{0}', space=vmem, size = 0x8000, scoped, tag = 'output window, operand 1, single buffered']
    #allocation16 [shape = 's32[1]{0}', space=sflag, size = 0x4, scoped, tag = 'scoped memory for tpu_custom_call.1']
    %14 = vsyncpa [#allocation4], 0
    %15 = vsyncpa [#allocation7], 0
    %16 = vsyncpa [#allocation10], 0
    %17 = vsyncpa [#allocation13], 0
    %18 = vsyncpa [#allocation5], 0
    %19 = vsyncpa [#allocation16], 0
    // Predicated region
    $region2: #{tpu_custom_call.1} parent=1 // pred_check
      _
    $region3: #{tpu_custom_call.1} parent=1 // pred_check_branch
      %21 = sbr.rel (0) target = $region5
    $region4: #{tpu_custom_call.1} parent=1 // pred_region
      %23 = vsyncadd [#allocation4], 0
      %s24 = sshll.u32 %s0, 4
      %s25 = int_to_ptr.hbm [resolvable:$true] %s24
      %s26 = sshll.u32 [#allocation3], 4
      %s27 = int_to_ptr.vmem [resolvable:$true] %s26
      %32 = dma.hbm_to_vmem [thread:$0]  %s25, 1024, %s27, [#allocation4], 64, 64, 4
    $region5: #{tpu_custom_call.1} parent=1 // pred_fallthru
      _
    // Predicated region
    $region6: #{tpu_custom_call.1} parent=1 // pred_check
      _
    $region7: #{tpu_custom_call.1} parent=1 // pred_check_branch
      %34 = sbr.rel (0) target = $region9
    $region8: #{tpu_custom_call.1} parent=1 // pred_region
      %36 = vsyncadd [#allocation7], 0
      %s37 = sshll.u32 %s1, 4
      %s38 = int_to_ptr.hbm [resolvable:$true] %s37
      %s39 = sshll.u32 [#allocation6], 4
      %s40 = int_to_ptr.vmem [resolvable:$true] %s39
      %45 = dma.hbm_to_vmem [thread:$0]  %s38, 1024, %s40, [#allocation7], 64, 64, 4
    $region9: #{tpu_custom_call.1} parent=1 // pred_fallthru
      _
    // Predicated region
    $region10: #{tpu_custom_call.1} parent=1 // pred_check
      _
    $region11: #{tpu_custom_call.1} parent=1 // pred_check_branch
      %47 = sbr.rel (0) target = $region13
    $region12: #{tpu_custom_call.1} parent=1 // pred_region
      %49 = vsyncadd [#allocation7], 0
      %s50 = sshll.u32 %s2, 4
      %s51 = int_to_ptr.hbm [resolvable:$true] %s50
      %s52 = sshll.u32 [#allocation8], 4
      %s53 = int_to_ptr.vmem [resolvable:$true] %s52
      %58 = dma.hbm_to_vmem [thread:$0]  %s51, 1024, %s53, [#allocation7], 64, 64, 4
    $region13: #{tpu_custom_call.1} parent=1 // pred_fallthru
      _
    // Predicated region
    $region14: #{tpu_custom_call.1} parent=1 // pred_check
      _
    $region15: #{tpu_custom_call.1} parent=1 // pred_check_branch
      %60 = sbr.rel (0) target = $region17
    $region16: #{tpu_custom_call.1} parent=1 // pred_region
      %62 = vsyncadd [#allocation10], 0
      %s63 = sshll.u32 %s3, 4
      %s64 = int_to_ptr.hbm [resolvable:$true] %s63
      %s65 = sshll.u32 [#allocation9], 4
      %s66 = int_to_ptr.vmem [resolvable:$true] %s65
      %71 = dma.hbm_to_vmem [thread:$0]  %s64, 2048, %s66, [#allocation10], 128, 128, 8
    $region17: #{tpu_custom_call.1} parent=1 // pred_fallthru
      _
    // Predicated region
    $region18: #{tpu_custom_call.1} parent=1 // pred_check
      _
    $region19: #{tpu_custom_call.1} parent=1 // pred_check_branch
      %73 = sbr.rel (0) target = $region21
    $region20: #{tpu_custom_call.1} parent=1 // pred_region
      %75 = vsyncadd [#allocation10], 0
      %s76 = sshll.u32 %s4, 4
      %s77 = int_to_ptr.hbm [resolvable:$true] %s76
      %s78 = sshll.u32 [#allocation11], 4
      %s79 = int_to_ptr.vmem [resolvable:$true] %s78
      %84 = dma.hbm_to_vmem [thread:$0]  %s77, 2048, %s79, [#allocation10], 128, 128, 8
    $region21: #{tpu_custom_call.1} parent=1 // pred_fallthru
      _
    // Predicated region
    $region22: #{tpu_custom_call.1} parent=1 // pred_check
      _
    $region23: #{tpu_custom_call.1} parent=1 // pred_check_branch
      %86 = sbr.rel (0) target = $region25
    $region24: #{tpu_custom_call.1} parent=1 // pred_region
      _
    $region25: #{tpu_custom_call.1} parent=1 // pred_fallthru
      _
    // Predicated region
    $region26: #{tpu_custom_call.1} parent=1 // pred_check
      _
    $region27: #{tpu_custom_call.1} parent=1 // pred_check_branch
      %88 = sbr.rel (0) target = $region29
    $region28: #{tpu_custom_call.1} parent=1 // pred_region
      %90 = vsyncadd [#allocation13], 0
      %s91 = sshll.u32 %s6, 4
      %s92 = int_to_ptr.hbm [resolvable:$true] %s91
      %s93 = sshll.u32 [#allocation12], 4
      %s94 = int_to_ptr.vmem [resolvable:$true] %s93
      %99 = dma.hbm_to_vmem [thread:$0]  %s92, 2048, %s94, [#allocation13], 128, 128, 8
    $region29: #{tpu_custom_call.1} parent=1 // pred_fallthru
      _
    // Predicated region
    $region30: #{tpu_custom_call.1} parent=1 // pred_check
      _
    $region31: #{tpu_custom_call.1} parent=1 // pred_check_branch
      %101 = sbr.rel (0) target = $region33
    $region32: #{tpu_custom_call.1} parent=1 // pred_region
      %103 = dma.done [#allocation4], 1024
    $region33: #{tpu_custom_call.1} parent=1 // pred_fallthru
      _
    // Predicated region
    $region34: #{tpu_custom_call.1} parent=1 // pred_check
      _
    $region35: #{tpu_custom_call.1} parent=1 // pred_check_branch
      %105 = sbr.rel (0) target = $region37
    $region36: #{tpu_custom_call.1} parent=1 // pred_region
      %107 = dma.done [#allocation7], 1024
    $region37: #{tpu_custom_call.1} parent=1 // pred_fallthru
      _
    // Predicated region
    $region38: #{tpu_custom_call.1} parent=1 // pred_check
      _
    $region39: #{tpu_custom_call.1} parent=1 // pred_check_branch
      %109 = sbr.rel (0) target = $region41
    $region40: #{tpu_custom_call.1} parent=1 // pred_region
      %111 = dma.done [#allocation7], 1024
    $region41: #{tpu_custom_call.1} parent=1 // pred_fallthru
      _
    // Predicated region
    $region42: #{tpu_custom_call.1} parent=1 // pred_check
      _
    $region43: #{tpu_custom_call.1} parent=1 // pred_check_branch
      %113 = sbr.rel (0) target = $region45
    $region44: #{tpu_custom_call.1} parent=1 // pred_region
      %115 = dma.done [#allocation10], 2048
    $region45: #{tpu_custom_call.1} parent=1 // pred_fallthru
      _
    // Predicated region
    $region46: #{tpu_custom_call.1} parent=1 // pred_check
      _
    $region47: #{tpu_custom_call.1} parent=1 // pred_check_branch
      %117 = sbr.rel (0) target = $region49
    $region48: #{tpu_custom_call.1} parent=1 // pred_region
      %119 = dma.done [#allocation10], 2048
    $region49: #{tpu_custom_call.1} parent=1 // pred_fallthru
      _
    // Predicated region
    $region50: #{tpu_custom_call.1} parent=1 // pred_check
      _
    $region51: #{tpu_custom_call.1} parent=1 // pred_check_branch
      %121 = sbr.rel (0) target = $region53
    $region52: #{tpu_custom_call.1} parent=1 // pred_region
      %123 = dma.done [#allocation13], 2048
    $region53: #{tpu_custom_call.1} parent=1 // pred_fallthru
      _
    %p124 = scmp.eq.s32.totalorder 0, 0
    // Predicated region
    $region54: #{tpu_custom_call.1} parent=1 // pred_check
      %p125 = pneg %p124
    $region55: #{tpu_custom_call.1} parent=1 // pred_check_branch
      %127 = sbr.rel (%p125) target = $region57
    $region56: #{tpu_custom_call.1} parent=1 // pred_region
      %128 = vst [vmem:[#allocation2] sm:$0xff] 0.0
      %129 = vst [vmem:[#allocation2 + $0x8] sm:$0xff] 0.0
      %130 = vst [vmem:[#allocation2 + $0x10] sm:$0xff] 0.0
      %131 = vst [vmem:[#allocation2 + $0x18] sm:$0xff] 0.0
      %132 = vst [vmem:[#allocation2 + $0x20] sm:$0xff] 0.0
      %133 = vst [vmem:[#allocation2 + $0x28] sm:$0xff] 0.0
      %134 = vst [vmem:[#allocation2 + $0x30] sm:$0xff] 0.0
      %135 = vst [vmem:[#allocation2 + $0x38] sm:$0xff] 0.0
      %136 = vst [vmem:[#allocation2 + $0x40] sm:$0xff] 0.0
      %137 = vst [vmem:[#allocation2 + $0x48] sm:$0xff] 0.0
      %138 = vst [vmem:[#allocation2 + $0x50] sm:$0xff] 0.0
      %139 = vst [vmem:[#allocation2 + $0x58] sm:$0xff] 0.0
      %140 = vst [vmem:[#allocation2 + $0x60] sm:$0xff] 0.0
      %141 = vst [vmem:[#allocation2 + $0x68] sm:$0xff] 0.0
      %142 = vst [vmem:[#allocation2 + $0x70] sm:$0xff] 0.0
      %143 = vst [vmem:[#allocation2 + $0x78] sm:$0xff] 0.0
    $region57: #{tpu_custom_call.1} parent=1 // pred_fallthru
      _
    %v144 = vld [vmem:[#allocation2] sm:$0xff]
    %v145 = vld [vmem:[#allocation2 + $0x8] sm:$0xff]
    %v146 = vld [vmem:[#allocation2 + $0x10] sm:$0xff]
    %v147 = vld [vmem:[#allocation2 + $0x18] sm:$0xff]
    %v148 = vld [vmem:[#allocation2 + $0x20] sm:$0xff]
    %v149 = vld [vmem:[#allocation2 + $0x28] sm:$0xff]
    %v150 = vld [vmem:[#allocation2 + $0x30] sm:$0xff]
    %v151 = vld [vmem:[#allocation2 + $0x38] sm:$0xff]
    %v152 = vld [vmem:[#allocation2 + $0x40] sm:$0xff]
    %v153 = vld [vmem:[#allocation2 + $0x48] sm:$0xff]
    %v154 = vld [vmem:[#allocation2 + $0x50] sm:$0xff]
    %v155 = vld [vmem:[#allocation2 + $0x58] sm:$0xff]
    %v156 = vld [vmem:[#allocation2 + $0x60] sm:$0xff]
    %v157 = vld [vmem:[#allocation2 + $0x68] sm:$0xff]
    %v158 = vld [vmem:[#allocation2 + $0x70] sm:$0xff]
    %v159 = vld [vmem:[#allocation2 + $0x78] sm:$0xff]
    %v160 = vld [vmem:[#allocation3] sm:$0xf]
    %v161 = vld [vmem:[#allocation3 + $0x4] sm:$0xf]
    %v162 = vld [vmem:[#allocation3 + $0x8] sm:$0xf]
    %v163 = vld [vmem:[#allocation3 + $0xc] sm:$0xf]
    %v164 = vld [vmem:[#allocation3 + $0x10] sm:$0xf]
    %v165 = vld [vmem:[#allocation3 + $0x14] sm:$0xf]
    %v166 = vld [vmem:[#allocation3 + $0x18] sm:$0xf]
    %v167 = vld [vmem:[#allocation3 + $0x1c] sm:$0xf]
    %v168 = vld [vmem:[#allocation3 + $0x20] sm:$0xf]
    %v169 = vld [vmem:[#allocation3 + $0x24] sm:$0xf]
    %v170 = vld [vmem:[#allocation3 + $0x28] sm:$0xf]
    %v171 = vld [vmem:[#allocation3 + $0x2c] sm:$0xf]
    %v172 = vld [vmem:[#allocation3 + $0x30] sm:$0xf]
    %v173 = vld [vmem:[#allocation3 + $0x34] sm:$0xf]
    %v174 = vld [vmem:[#allocation3 + $0x38] sm:$0xf]
    %v175 = vld [vmem:[#allocation3 + $0x3c] sm:$0xf]
    %v176 = vld [vmem:[#allocation6] sm:$0xf]
    %v177 = vld [vmem:[#allocation6 + $0x4] sm:$0xf]
    %v178 = vld [vmem:[#allocation6 + $0x8] sm:$0xf]
    %v179 = vld [vmem:[#allocation6 + $0xc] sm:$0xf]
    %v180 = vld [vmem:[#allocation6 + $0x10] sm:$0xf]
    %v181 = vld [vmem:[#allocation6 + $0x14] sm:$0xf]
    %v182 = vld [vmem:[#allocation6 + $0x18] sm:$0xf]
    %v183 = vld [vmem:[#allocation6 + $0x1c] sm:$0xf]
    %v184 = vld [vmem:[#allocation6 + $0x20] sm:$0xf]
    %v185 = vld [vmem:[#allocation6 + $0x24] sm:$0xf]
    %v186 = vld [vmem:[#allocation6 + $0x28] sm:$0xf]
    %v187 = vld [vmem:[#allocation6 + $0x2c] sm:$0xf]
    %v188 = vld [vmem:[#allocation6 + $0x30] sm:$0xf]
    %v189 = vld [vmem:[#allocation6 + $0x34] sm:$0xf]
    %v190 = vld [vmem:[#allocation6 + $0x38] sm:$0xf]
    %v191 = vld [vmem:[#allocation6 + $0x3c] sm:$0xf]
    %v208 = vunpack.c.l.b16 %v160
    %v209 = vunpack.c.l.b16 %v161
    %v210 = vunpack.c.l.b16 %v162
    %v211 = vunpack.c.l.b16 %v163
    %v212 = vunpack.c.l.b16 %v164
    %v213 = vunpack.c.l.b16 %v165
    %v214 = vunpack.c.l.b16 %v166
    %v215 = vunpack.c.l.b16 %v167
    %v216 = vunpack.c.l.b16 %v168
    %v217 = vunpack.c.l.b16 %v169
    %v218 = vunpack.c.l.b16 %v170
    %v219 = vunpack.c.l.b16 %v171
    %v220 = vunpack.c.l.b16 %v172
    %v221 = vunpack.c.l.b16 %v173
    %v222 = vunpack.c.l.b16 %v174
    %v223 = vunpack.c.l.b16 %v175
    %v224 = vpack.c.b16 %v209, %v208
    %v225 = vpack.c.b16 %v211, %v210
    %v226 = vpack.c.b16 %v213, %v212
    %v227 = vpack.c.b16 %v215, %v214
    %v228 = vpack.c.b16 %v217, %v216
    %v229 = vpack.c.b16 %v219, %v218
    %v230 = vpack.c.b16 %v221, %v220
    %v231 = vpack.c.b16 %v223, %v222
    %v256 = vunpack.c.l.b16 %v176
    %v257 = vunpack.c.l.b16 %v177
    %v258 = vunpack.c.l.b16 %v178
    %v259 = vunpack.c.l.b16 %v179
    %v260 = vunpack.c.l.b16 %v180
    %v261 = vunpack.c.l.b16 %v181
    %v262 = vunpack.c.l.b16 %v182
    %v263 = vunpack.c.l.b16 %v183
    %v264 = vunpack.c.l.b16 %v184
    %v265 = vunpack.c.l.b16 %v185
    %v266 = vunpack.c.l.b16 %v186
    %v267 = vunpack.c.l.b16 %v187
    %v268 = vunpack.c.l.b16 %v188
    %v269 = vunpack.c.l.b16 %v189
    %v270 = vunpack.c.l.b16 %v190
    %v271 = vunpack.c.l.b16 %v191
    %v272 = vpack.c.b16 %v257, %v256
    %v273 = vpack.c.b16 %v259, %v258
    %v274 = vpack.c.b16 %v261, %v260
    %v275 = vpack.c.b16 %v263, %v262
    %v276 = vpack.c.b16 %v265, %v264
    %v277 = vpack.c.b16 %v267, %v266
    %v278 = vpack.c.b16 %v269, %v268
    %v279 = vpack.c.b16 %v271, %v270
    %288 = vmatpush.bf16.msra.mxu0 %v279
    %289 = vmatpush.bf16.msra.mxu0 %v278
    %290 = vmatpush.bf16.msra.mxu0 %v277
    %291 = vmatpush.bf16.msra.mxu0 %v276
    %292 = vmatpush.bf16.msra.mxu0 %v275
    %293 = vmatpush.bf16.msra.mxu0 %v274
    %294 = vmatpush.bf16.msra.mxu0 %v273
    %295 = vmatpush.bf16.msra.mxu0 %v272
    %296 = vmatmul.bf16.gmra.mxu0 %v224
    %v297 = vpop.f32.mrf.mxu0
    %v298 = vadd.f32 0.0, %v297
    %v299 = vpop.f32.mrf.mxu0
    %v300 = vadd.f32 0.0, %v299
    %301 = vmatmul.bf16.gmra.mxu0 %v225
    %v302 = vpop.f32.mrf.mxu0
    %v303 = vadd.f32 0.0, %v302
    %v304 = vpop.f32.mrf.mxu0
    %v305 = vadd.f32 0.0, %v304
    %306 = vmatmul.bf16.gmra.mxu0 %v226
    %v307 = vpop.f32.mrf.mxu0
    %v308 = vadd.f32 0.0, %v307
    %v309 = vpop.f32.mrf.mxu0
    %v310 = vadd.f32 0.0, %v309
    %311 = vmatmul.bf16.gmra.mxu0 %v227
    %v312 = vpop.f32.mrf.mxu0
    %v313 = vadd.f32 0.0, %v312
    %v314 = vpop.f32.mrf.mxu0
    %v315 = vadd.f32 0.0, %v314
    %316 = vmatmul.bf16.gmra.mxu0 %v228
    %v317 = vpop.f32.mrf.mxu0
    %v318 = vadd.f32 0.0, %v317
    %v319 = vpop.f32.mrf.mxu0
    %v320 = vadd.f32 0.0, %v319
    %321 = vmatmul.bf16.gmra.mxu0 %v229
    %v322 = vpop.f32.mrf.mxu0
    %v323 = vadd.f32 0.0, %v322
    %v324 = vpop.f32.mrf.mxu0
    %v325 = vadd.f32 0.0, %v324
    %326 = vmatmul.bf16.gmra.mxu0 %v230
    %v327 = vpop.f32.mrf.mxu0
    %v328 = vadd.f32 0.0, %v327
    %v329 = vpop.f32.mrf.mxu0
    %v330 = vadd.f32 0.0, %v329
    %331 = vmatmul.bf16.gmra.mxu0 %v231
    %v332 = vpop.f32.mrf.mxu0
    %v333 = vadd.f32 0.0, %v332
    %v334 = vpop.f32.mrf.mxu0
    %v335 = vadd.f32 0.0, %v334
    %336 = vdwg.mxu0
    %v337 = vadd.f32 %v144, %v298
    %v338 = vadd.f32 %v145, %v300
    %v339 = vadd.f32 %v146, %v303
    %v340 = vadd.f32 %v147, %v305
    %v341 = vadd.f32 %v148, %v308
    %v342 = vadd.f32 %v149, %v310
    %v343 = vadd.f32 %v150, %v313
    %v344 = vadd.f32 %v151, %v315
    %v345 = vadd.f32 %v152, %v318
    %v346 = vadd.f32 %v153, %v320
    %v347 = vadd.f32 %v154, %v323
    %v348 = vadd.f32 %v155, %v325
    %v349 = vadd.f32 %v156, %v328
    %v350 = vadd.f32 %v157, %v330
    %v351 = vadd.f32 %v158, %v333
    %v352 = vadd.f32 %v159, %v335
    %353 = vst [vmem:[#allocation2] sm:$0xff] %v337
    %354 = vst [vmem:[#allocation2 + $0x8] sm:$0xff] %v338
    %355 = vst [vmem:[#allocation2 + $0x10] sm:$0xff] %v339
    %356 = vst [vmem:[#allocation2 + $0x18] sm:$0xff] %v340
    %357 = vst [vmem:[#allocation2 + $0x20] sm:$0xff] %v341
    %358 = vst [vmem:[#allocation2 + $0x28] sm:$0xff] %v342
    %359 = vst [vmem:[#allocation2 + $0x30] sm:$0xff] %v343
    %360 = vst [vmem:[#allocation2 + $0x38] sm:$0xff] %v344
    %361 = vst [vmem:[#allocation2 + $0x40] sm:$0xff] %v345
    %362 = vst [vmem:[#allocation2 + $0x48] sm:$0xff] %v346
    %363 = vst [vmem:[#allocation2 + $0x50] sm:$0xff] %v347
    %364 = vst [vmem:[#allocation2 + $0x58] sm:$0xff] %v348
    %365 = vst [vmem:[#allocation2 + $0x60] sm:$0xff] %v349
    %366 = vst [vmem:[#allocation2 + $0x68] sm:$0xff] %v350
    %367 = vst [vmem:[#allocation2 + $0x70] sm:$0xff] %v351
    %368 = vst [vmem:[#allocation2 + $0x78] sm:$0xff] %v352
    // Predicated region
    $region58: #{tpu_custom_call.1} parent=1 // pred_check
      %p369 = pneg %p124
    $region59: #{tpu_custom_call.1} parent=1 // pred_check_branch
      %371 = sbr.rel (%p369) target = $region61
    $region60: #{tpu_custom_call.1} parent=1 // pred_region
      %v372 = vld [vmem:[#allocation2] sm:$0xff]
      %v373 = vld [vmem:[#allocation2 + $0x8] sm:$0xff]
      %v374 = vld [vmem:[#allocation2 + $0x10] sm:$0xff]
      %v375 = vld [vmem:[#allocation2 + $0x18] sm:$0xff]
      %v376 = vld [vmem:[#allocation2 + $0x20] sm:$0xff]
      %v377 = vld [vmem:[#allocation2 + $0x28] sm:$0xff]
      %v378 = vld [vmem:[#allocation2 + $0x30] sm:$0xff]
      %v379 = vld [vmem:[#allocation2 + $0x38] sm:$0xff]
      %v380 = vld [vmem:[#allocation2 + $0x40] sm:$0xff]
      %v381 = vld [vmem:[#allocation2 + $0x48] sm:$0xff]
      %v382 = vld [vmem:[#allocation2 + $0x50] sm:$0xff]
      %v383 = vld [vmem:[#allocation2 + $0x58] sm:$0xff]
      %v384 = vld [vmem:[#allocation2 + $0x60] sm:$0xff]
      %v385 = vld [vmem:[#allocation2 + $0x68] sm:$0xff]
      %v386 = vld [vmem:[#allocation2 + $0x70] sm:$0xff]
      %v387 = vld [vmem:[#allocation2 + $0x78] sm:$0xff]
      %v388 = vld [vmem:[#allocation9] sm:$0xff]
      %v389 = vld [vmem:[#allocation9 + $0x8] sm:$0xff]
      %v390 = vld [vmem:[#allocation9 + $0x10] sm:$0xff]
      %v391 = vld [vmem:[#allocation9 + $0x18] sm:$0xff]
      %v392 = vld [vmem:[#allocation9 + $0x20] sm:$0xff]
      %v393 = vld [vmem:[#allocation9 + $0x28] sm:$0xff]
      %v394 = vld [vmem:[#allocation9 + $0x30] sm:$0xff]
      %v395 = vld [vmem:[#allocation9 + $0x38] sm:$0xff]
      %v396 = vld [vmem:[#allocation9 + $0x40] sm:$0xff]
      %v397 = vld [vmem:[#allocation9 + $0x48] sm:$0xff]
      %v398 = vld [vmem:[#allocation9 + $0x50] sm:$0xff]
      %v399 = vld [vmem:[#allocation9 + $0x58] sm:$0xff]
      %v400 = vld [vmem:[#allocation9 + $0x60] sm:$0xff]
      %v401 = vld [vmem:[#allocation9 + $0x68] sm:$0xff]
      %v402 = vld [vmem:[#allocation9 + $0x70] sm:$0xff]
      %v403 = vld [vmem:[#allocation9 + $0x78] sm:$0xff]
      %v404 = vld [vmem:[#allocation8] sm:$0xf]
      %v405 = vld [vmem:[#allocation8 + $0x4] sm:$0xf]
      %v406 = vld [vmem:[#allocation8 + $0x8] sm:$0xf]
      %v407 = vld [vmem:[#allocation8 + $0xc] sm:$0xf]
      %v408 = vld [vmem:[#allocation8 + $0x10] sm:$0xf]
      %v409 = vld [vmem:[#allocation8 + $0x14] sm:$0xf]
      %v410 = vld [vmem:[#allocation8 + $0x18] sm:$0xf]
      %v411 = vld [vmem:[#allocation8 + $0x1c] sm:$0xf]
      %v412 = vld [vmem:[#allocation8 + $0x20] sm:$0xf]
      %v413 = vld [vmem:[#allocation8 + $0x24] sm:$0xf]
      %v414 = vld [vmem:[#allocation8 + $0x28] sm:$0xf]
      %v415 = vld [vmem:[#allocation8 + $0x2c] sm:$0xf]
      %v416 = vld [vmem:[#allocation8 + $0x30] sm:$0xf]
      %v417 = vld [vmem:[#allocation8 + $0x34] sm:$0xf]
      %v418 = vld [vmem:[#allocation8 + $0x38] sm:$0xf]
      %v419 = vld [vmem:[#allocation8 + $0x3c] sm:$0xf]
      %v420 = vunpack.c.l.bf16 %v404
      %v421 = vunpack.c.l.bf16 %v405
      %v422 = vunpack.c.l.bf16 %v406
      %v423 = vunpack.c.l.bf16 %v407
      %v424 = vunpack.c.l.bf16 %v408
      %v425 = vunpack.c.l.bf16 %v409
      %v426 = vunpack.c.l.bf16 %v410
      %v427 = vunpack.c.l.bf16 %v411
      %v428 = vunpack.c.l.bf16 %v412
      %v429 = vunpack.c.l.bf16 %v413
      %v430 = vunpack.c.l.bf16 %v414
      %v431 = vunpack.c.l.bf16 %v415
      %v432 = vunpack.c.l.bf16 %v416
      %v433 = vunpack.c.l.bf16 %v417
      %v434 = vunpack.c.l.bf16 %v418
      %v435 = vunpack.c.l.bf16 %v419
      %v436 = vld [vmem:[#allocation11] sm:$0xff]
      %v437 = vld [vmem:[#allocation11 + $0x8] sm:$0xff]
      %v438 = vld [vmem:[#allocation11 + $0x10] sm:$0xff]
      %v439 = vld [vmem:[#allocation11 + $0x18] sm:$0xff]
      %v440 = vld [vmem:[#allocation11 + $0x20] sm:$0xff]
      %v441 = vld [vmem:[#allocation11 + $0x28] sm:$0xff]
      %v442 = vld [vmem:[#allocation11 + $0x30] sm:$0xff]
      %v443 = vld [vmem:[#allocation11 + $0x38] sm:$0xff]
      %v444 = vld [vmem:[#allocation11 + $0x40] sm:$0xff]
      %v445 = vld [vmem:[#allocation11 + $0x48] sm:$0xff]
      %v446 = vld [vmem:[#allocation11 + $0x50] sm:$0xff]
      %v447 = vld [vmem:[#allocation11 + $0x58] sm:$0xff]
      %v448 = vld [vmem:[#allocation11 + $0x60] sm:$0xff]
      %v449 = vld [vmem:[#allocation11 + $0x68] sm:$0xff]
      %v450 = vld [vmem:[#allocation11 + $0x70] sm:$0xff]
      %v451 = vld [vmem:[#allocation11 + $0x78] sm:$0xff]
      %452 = vmatpush.msra.mxu0 %v451
      %453 = vmatpush.msra.mxu0 %v450
      %454 = vmatpush.msra.mxu0 %v449
      %455 = vmatpush.msra.mxu0 %v448
      %456 = vmatpush.msra.mxu0 %v447
      %457 = vmatpush.msra.mxu0 %v446
      %458 = vmatpush.msra.mxu0 %v445
      %459 = vmatpush.msra.mxu0 %v444
      %460 = vmatpush.msra.mxu0 %v443
      %461 = vmatpush.msra.mxu0 %v442
      %462 = vmatpush.msra.mxu0 %v441
      %463 = vmatpush.msra.mxu0 %v440
      %464 = vmatpush.msra.mxu0 %v439
      %465 = vmatpush.msra.mxu0 %v438
      %466 = vmatpush.msra.mxu0 %v437
      %467 = vmatpush.msra.mxu0 %v436
      %468 = vmatmul.f32.gmra.mxu0 %v420
      %v469 = vpop.f32.mrf.mxu0
      %v470 = vadd.f32 0.0, %v469
      %471 = vmatmul.f32.gmra.mxu0 %v421
      %v472 = vpop.f32.mrf.mxu0
      %v473 = vadd.f32 0.0, %v472
      %474 = vmatmul.f32.gmra.mxu0 %v422
      %v475 = vpop.f32.mrf.mxu0
      %v476 = vadd.f32 0.0, %v475
      %477 = vmatmul.f32.gmra.mxu0 %v423
      %v478 = vpop.f32.mrf.mxu0
      %v479 = vadd.f32 0.0, %v478
      %480 = vmatmul.f32.gmra.mxu0 %v424
      %v481 = vpop.f32.mrf.mxu0
      %v482 = vadd.f32 0.0, %v481
      %483 = vmatmul.f32.gmra.mxu0 %v425
      %v484 = vpop.f32.mrf.mxu0
      %v485 = vadd.f32 0.0, %v484
      %486 = vmatmul.f32.gmra.mxu0 %v426
      %v487 = vpop.f32.mrf.mxu0
      %v488 = vadd.f32 0.0, %v487
      %489 = vmatmul.f32.gmra.mxu0 %v427
      %v490 = vpop.f32.mrf.mxu0
      %v491 = vadd.f32 0.0, %v490
      %492 = vmatmul.f32.gmra.mxu0 %v428
      %v493 = vpop.f32.mrf.mxu0
      %v494 = vadd.f32 0.0, %v493
      %495 = vmatmul.f32.gmra.mxu0 %v429
      %v496 = vpop.f32.mrf.mxu0
      %v497 = vadd.f32 0.0, %v496
      %498 = vmatmul.f32.gmra.mxu0 %v430
      %v499 = vpop.f32.mrf.mxu0
      %v500 = vadd.f32 0.0, %v499
      %501 = vmatmul.f32.gmra.mxu0 %v431
      %v502 = vpop.f32.mrf.mxu0
      %v503 = vadd.f32 0.0, %v502
      %504 = vmatmul.f32.gmra.mxu0 %v432
      %v505 = vpop.f32.mrf.mxu0
      %v506 = vadd.f32 0.0, %v505
      %507 = vmatmul.f32.gmra.mxu0 %v433
      %v508 = vpop.f32.mrf.mxu0
      %v509 = vadd.f32 0.0, %v508
      %510 = vmatmul.f32.gmra.mxu0 %v434
      %v511 = vpop.f32.mrf.mxu0
      %v512 = vadd.f32 0.0, %v511
      %513 = vmatmul.f32.gmra.mxu0 %v435
      %v514 = vpop.f32.mrf.mxu0
      %v515 = vadd.f32 0.0, %v514
      %516 = vdwg.mxu0
      %517 = vmatpush.msra.mxu0 %v403
      %518 = vmatpush.msra.mxu0 %v402
      %519 = vmatpush.msra.mxu0 %v401
      %520 = vmatpush.msra.mxu0 %v400
      %521 = vmatpush.msra.mxu0 %v399
      %522 = vmatpush.msra.mxu0 %v398
      %523 = vmatpush.msra.mxu0 %v397
      %524 = vmatpush.msra.mxu0 %v396
      %525 = vmatpush.msra.mxu0 %v395
      %526 = vmatpush.msra.mxu0 %v394
      %527 = vmatpush.msra.mxu0 %v393
      %528 = vmatpush.msra.mxu0 %v392
      %529 = vmatpush.msra.mxu0 %v391
      %530 = vmatpush.msra.mxu0 %v390
      %531 = vmatpush.msra.mxu0 %v389
      %532 = vmatpush.msra.mxu0 %v388
      %533 = vmatmul.f32.gmra.mxu0 %v372
      %v534 = vpop.f32.mrf.mxu0
      %v535 = vadd.f32 %v470, %v534
      %536 = vmatmul.f32.gmra.mxu0 %v373
      %v537 = vpop.f32.mrf.mxu0
      %v538 = vadd.f32 %v473, %v537
      %539 = vmatmul.f32.gmra.mxu0 %v374
      %v540 = vpop.f32.mrf.mxu0
      %v541 = vadd.f32 %v476, %v540
      %542 = vmatmul.f32.gmra.mxu0 %v375
      %v543 = vpop.f32.mrf.mxu0
      %v544 = vadd.f32 %v479, %v543
      %545 = vmatmul.f32.gmra.mxu0 %v376
      %v546 = vpop.f32.mrf.mxu0
      %v547 = vadd.f32 %v482, %v546
      %548 = vmatmul.f32.gmra.mxu0 %v377
      %v549 = vpop.f32.mrf.mxu0
      %v550 = vadd.f32 %v485, %v549
      %551 = vmatmul.f32.gmra.mxu0 %v378
      %v552 = vpop.f32.mrf.mxu0
      %v553 = vadd.f32 %v488, %v552
      %554 = vmatmul.f32.gmra.mxu0 %v379
      %v555 = vpop.f32.mrf.mxu0
      %v556 = vadd.f32 %v491, %v555
      %557 = vmatmul.f32.gmra.mxu0 %v380
      %v558 = vpop.f32.mrf.mxu0
      %v559 = vadd.f32 %v494, %v558
      %560 = vmatmul.f32.gmra.mxu0 %v381
      %v561 = vpop.f32.mrf.mxu0
      %v562 = vadd.f32 %v497, %v561
      %563 = vmatmul.f32.gmra.mxu0 %v382
      %v564 = vpop.f32.mrf.mxu0
      %v565 = vadd.f32 %v500, %v564
      %566 = vmatmul.f32.gmra.mxu0 %v383
      %v567 = vpop.f32.mrf.mxu0
      %v568 = vadd.f32 %v503, %v567
      %569 = vmatmul.f32.gmra.mxu0 %v384
      %v570 = vpop.f32.mrf.mxu0
      %v571 = vadd.f32 %v506, %v570
      %572 = vmatmul.f32.gmra.mxu0 %v385
      %v573 = vpop.f32.mrf.mxu0
      %v574 = vadd.f32 %v509, %v573
      %575 = vmatmul.f32.gmra.mxu0 %v386
      %v576 = vpop.f32.mrf.mxu0
      %v577 = vadd.f32 %v512, %v576
      %578 = vmatmul.f32.gmra.mxu0 %v387
      %v579 = vpop.f32.mrf.mxu0
      %v580 = vadd.f32 %v515, %v579
      %581 = vdwg.mxu0
      %v582 = vld [vmem:[%s5] sm:$0x1]
      %v584 = vperm.slane %v582, 0
      %v586 = vadd.f32 %v535, %v584
      %v587 = vadd.f32 %v538, %v584
      %v588 = vadd.f32 %v541, %v584
      %v589 = vadd.f32 %v544, %v584
      %v590 = vadd.f32 %v547, %v584
      %v591 = vadd.f32 %v550, %v584
      %v592 = vadd.f32 %v553, %v584
      %v593 = vadd.f32 %v556, %v584
      %v594 = vadd.f32 %v559, %v584
      %v595 = vadd.f32 %v562, %v584
      %v596 = vadd.f32 %v565, %v584
      %v597 = vadd.f32 %v568, %v584
      %v598 = vadd.f32 %v571, %v584
      %v599 = vadd.f32 %v574, %v584
      %v600 = vadd.f32 %v577, %v584
      %v601 = vadd.f32 %v580, %v584
      %v602 = vmax.f32 %v586, 0.0
      %v603 = vmax.f32 %v587, 0.0
      %v604 = vmax.f32 %v588, 0.0
      %v605 = vmax.f32 %v589, 0.0
      %v606 = vmax.f32 %v590, 0.0
      %v607 = vmax.f32 %v591, 0.0
      %v608 = vmax.f32 %v592, 0.0
      %v609 = vmax.f32 %v593, 0.0
      %v610 = vmax.f32 %v594, 0.0
      %v611 = vmax.f32 %v595, 0.0
      %v612 = vmax.f32 %v596, 0.0
      %v613 = vmax.f32 %v597, 0.0
      %v614 = vmax.f32 %v598, 0.0
      %v615 = vmax.f32 %v599, 0.0
      %v616 = vmax.f32 %v600, 0.0
      %v617 = vmax.f32 %v601, 0.0
      %v618 = vpack.c.bf16 %v602, %v602
      %v619 = vpack.c.bf16 %v603, %v603
      %v620 = vpack.c.bf16 %v604, %v604
      %v621 = vpack.c.bf16 %v605, %v605
      %v622 = vpack.c.bf16 %v606, %v606
      %v623 = vpack.c.bf16 %v607, %v607
      %v624 = vpack.c.bf16 %v608, %v608
      %v625 = vpack.c.bf16 %v609, %v609
      %v626 = vpack.c.bf16 %v610, %v610
      %v627 = vpack.c.bf16 %v611, %v611
      %v628 = vpack.c.bf16 %v612, %v612
      %v629 = vpack.c.bf16 %v613, %v613
      %v630 = vpack.c.bf16 %v614, %v614
      %v631 = vpack.c.bf16 %v615, %v615
      %v632 = vpack.c.bf16 %v616, %v616
      %v633 = vpack.c.bf16 %v617, %v617
      %634 = vst [vmem:[#allocation14] sm:$0xf] %v618
      %635 = vst [vmem:[#allocation14 + $0x4] sm:$0xf] %v619
      %636 = vst [vmem:[#allocation14 + $0x8] sm:$0xf] %v620
      %637 = vst [vmem:[#allocation14 + $0xc] sm:$0xf] %v621
      %638 = vst [vmem:[#allocation14 + $0x10] sm:$0xf] %v622
      %639 = vst [vmem:[#allocation14 + $0x14] sm:$0xf] %v623
      %640 = vst [vmem:[#allocation14 + $0x18] sm:$0xf] %v624
      %641 = vst [vmem:[#allocation14 + $0x1c] sm:$0xf] %v625
      %642 = vst [vmem:[#allocation14 + $0x20] sm:$0xf] %v626
      %643 = vst [vmem:[#allocation14 + $0x24] sm:$0xf] %v627
      %644 = vst [vmem:[#allocation14 + $0x28] sm:$0xf] %v628
      %645 = vst [vmem:[#allocation14 + $0x2c] sm:$0xf] %v629
      %646 = vst [vmem:[#allocation14 + $0x30] sm:$0xf] %v630
      %647 = vst [vmem:[#allocation14 + $0x34] sm:$0xf] %v631
      %648 = vst [vmem:[#allocation14 + $0x38] sm:$0xf] %v632
      %649 = vst [vmem:[#allocation14 + $0x3c] sm:$0xf] %v633
      %v650 = vld [vmem:[#allocation12] sm:$0xff]
      %v651 = vld [vmem:[#allocation12 + $0x8] sm:$0xff]
      %v652 = vld [vmem:[#allocation12 + $0x10] sm:$0xff]
      %v653 = vld [vmem:[#allocation12 + $0x18] sm:$0xff]
      %v654 = vld [vmem:[#allocation12 + $0x20] sm:$0xff]
      %v655 = vld [vmem:[#allocation12 + $0x28] sm:$0xff]
      %v656 = vld [vmem:[#allocation12 + $0x30] sm:$0xff]
      %v657 = vld [vmem:[#allocation12 + $0x38] sm:$0xff]
      %v658 = vld [vmem:[#allocation12 + $0x40] sm:$0xff]
      %v659 = vld [vmem:[#allocation12 + $0x48] sm:$0xff]
      %v660 = vld [vmem:[#allocation12 + $0x50] sm:$0xff]
      %v661 = vld [vmem:[#allocation12 + $0x58] sm:$0xff]
      %v662 = vld [vmem:[#allocation12 + $0x60] sm:$0xff]
      %v663 = vld [vmem:[#allocation12 + $0x68] sm:$0xff]
      %v664 = vld [vmem:[#allocation12 + $0x70] sm:$0xff]
      %v665 = vld [vmem:[#allocation12 + $0x78] sm:$0xff]
      %666 = vmatpush.msra.mxu0 %v665
      %667 = vmatpush.msra.mxu0 %v664
      %668 = vmatpush.msra.mxu0 %v663
      %669 = vmatpush.msra.mxu0 %v662
      %670 = vmatpush.msra.mxu0 %v661
      %671 = vmatpush.msra.mxu0 %v660
      %672 = vmatpush.msra.mxu0 %v659
      %673 = vmatpush.msra.mxu0 %v658
      %674 = vmatpush.msra.mxu0 %v657
      %675 = vmatpush.msra.mxu0 %v656
      %676 = vmatpush.msra.mxu0 %v655
      %677 = vmatpush.msra.mxu0 %v654
      %678 = vmatpush.msra.mxu0 %v653
      %679 = vmatpush.msra.mxu0 %v652
      %680 = vmatpush.msra.mxu0 %v651
      %681 = vmatpush.msra.mxu0 %v650
      %682 = vmatmul.f32.gmra.mxu0 %v602
      %v683 = vpop.f32.mrf.mxu0
      %v684 = vadd.f32 0.0, %v683
      %685 = vmatmul.f32.gmra.mxu0 %v603
      %v686 = vpop.f32.mrf.mxu0
      %v687 = vadd.f32 0.0, %v686
      %688 = vmatmul.f32.gmra.mxu0 %v604
      %v689 = vpop.f32.mrf.mxu0
      %v690 = vadd.f32 0.0, %v689
      %691 = vmatmul.f32.gmra.mxu0 %v605
      %v692 = vpop.f32.mrf.mxu0
      %v693 = vadd.f32 0.0, %v692
      %694 = vmatmul.f32.gmra.mxu0 %v606
      %v695 = vpop.f32.mrf.mxu0
      %v696 = vadd.f32 0.0, %v695
      %697 = vmatmul.f32.gmra.mxu0 %v607
      %v698 = vpop.f32.mrf.mxu0
      %v699 = vadd.f32 0.0, %v698
      %700 = vmatmul.f32.gmra.mxu0 %v608
      %v701 = vpop.f32.mrf.mxu0
      %v702 = vadd.f32 0.0, %v701
      %703 = vmatmul.f32.gmra.mxu0 %v609
      %v704 = vpop.f32.mrf.mxu0
      %v705 = vadd.f32 0.0, %v704
      %706 = vmatmul.f32.gmra.mxu0 %v610
      %v707 = vpop.f32.mrf.mxu0
      %v708 = vadd.f32 0.0, %v707
      %709 = vmatmul.f32.gmra.mxu0 %v611
      %v710 = vpop.f32.mrf.mxu0
      %v711 = vadd.f32 0.0, %v710
      %712 = vmatmul.f32.gmra.mxu0 %v612
      %v713 = vpop.f32.mrf.mxu0
      %v714 = vadd.f32 0.0, %v713
      %715 = vmatmul.f32.gmra.mxu0 %v613
      %v716 = vpop.f32.mrf.mxu0
      %v717 = vadd.f32 0.0, %v716
      %718 = vmatmul.f32.gmra.mxu0 %v614
      %v719 = vpop.f32.mrf.mxu0
      %v720 = vadd.f32 0.0, %v719
      %721 = vmatmul.f32.gmra.mxu0 %v615
      %v722 = vpop.f32.mrf.mxu0
      %v723 = vadd.f32 0.0, %v722
      %724 = vmatmul.f32.gmra.mxu0 %v616
      %v725 = vpop.f32.mrf.mxu0
      %v726 = vadd.f32 0.0, %v725
      %727 = vmatmul.f32.gmra.mxu0 %v617
      %v728 = vpop.f32.mrf.mxu0
      %v729 = vadd.f32 0.0, %v728
      %730 = vdwg.mxu0
      %v731 = vpack.c.bf16 %v684, %v684
      %v732 = vpack.c.bf16 %v687, %v687
      %v733 = vpack.c.bf16 %v690, %v690
      %v734 = vpack.c.bf16 %v693, %v693
      %v735 = vpack.c.bf16 %v696, %v696
      %v736 = vpack.c.bf16 %v699, %v699
      %v737 = vpack.c.bf16 %v702, %v702
      %v738 = vpack.c.bf16 %v705, %v705
      %v739 = vpack.c.bf16 %v708, %v708
      %v740 = vpack.c.bf16 %v711, %v711
      %v741 = vpack.c.bf16 %v714, %v714
      %v742 = vpack.c.bf16 %v717, %v717
      %v743 = vpack.c.bf16 %v720, %v720
      %v744 = vpack.c.bf16 %v723, %v723
      %v745 = vpack.c.bf16 %v726, %v726
      %v746 = vpack.c.bf16 %v729, %v729
      %747 = vst [vmem:[#allocation15] sm:$0xf] %v731
      %748 = vst [vmem:[#allocation15 + $0x4] sm:$0xf] %v732
      %749 = vst [vmem:[#allocation15 + $0x8] sm:$0xf] %v733
      %750 = vst [vmem:[#allocation15 + $0xc] sm:$0xf] %v734
      %751 = vst [vmem:[#allocation15 + $0x10] sm:$0xf] %v735
      %752 = vst [vmem:[#allocation15 + $0x14] sm:$0xf] %v736
      %753 = vst [vmem:[#allocation15 + $0x18] sm:$0xf] %v737
      %754 = vst [vmem:[#allocation15 + $0x1c] sm:$0xf] %v738
      %755 = vst [vmem:[#allocation15 + $0x20] sm:$0xf] %v739
      %756 = vst [vmem:[#allocation15 + $0x24] sm:$0xf] %v740
      %757 = vst [vmem:[#allocation15 + $0x28] sm:$0xf] %v741
      %758 = vst [vmem:[#allocation15 + $0x2c] sm:$0xf] %v742
      %759 = vst [vmem:[#allocation15 + $0x30] sm:$0xf] %v743
      %760 = vst [vmem:[#allocation15 + $0x34] sm:$0xf] %v744
      %761 = vst [vmem:[#allocation15 + $0x38] sm:$0xf] %v745
      %762 = vst [vmem:[#allocation15 + $0x3c] sm:$0xf] %v746
    $region61: #{tpu_custom_call.1} parent=1 // pred_fallthru
      _
    // Predicated region
    $region62: #{tpu_custom_call.1} parent=1 // pred_check
      _
    $region63: #{tpu_custom_call.1} parent=1 // pred_check_branch
      %764 = sbr.rel (0) target = $region65
    $region64: #{tpu_custom_call.1} parent=1 // pred_region
      %766 = vsyncadd [#allocation5], 0
      %s767 = sshll.u32 [#allocation14], 4
      %s768 = int_to_ptr.vmem [resolvable:$true] %s767
      %s769 = sshll.u32 %s7, 4
      %s770 = int_to_ptr.hbm [resolvable:$true] %s769
      %775 = dma.vmem_to_hbm [thread:$0]  %s768, 1024, %s770, [#allocation5], 64, 64, 4
    $region65: #{tpu_custom_call.1} parent=1 // pred_fallthru
      _
    // Predicated region
    $region66: #{tpu_custom_call.1} parent=1 // pred_check
      _
    $region67: #{tpu_custom_call.1} parent=1 // pred_check_branch
      %777 = sbr.rel (0) target = $region69
    $region68: #{tpu_custom_call.1} parent=1 // pred_region
      %779 = vsyncadd [#allocation16], 0
      %s780 = sshll.u32 [#allocation15], 4
      %s781 = int_to_ptr.vmem [resolvable:$true] %s780
      %s782 = sshll.u32 %s8, 4
      %s783 = int_to_ptr.hbm [resolvable:$true] %s782
      %788 = dma.vmem_to_hbm [thread:$0]  %s781, 1024, %s783, [#allocation16], 64, 64, 4
    $region69: #{tpu_custom_call.1} parent=1 // pred_fallthru
      _
    // Predicated region
    $region70: #{tpu_custom_call.1} parent=1 // pred_check
      _
    $region71: #{tpu_custom_call.1} parent=1 // pred_check_branch
      %790 = sbr.rel (0) target = $region73
    $region72: #{tpu_custom_call.1} parent=1 // pred_region
      %792 = dma.done [#allocation5], 1024
    $region73: #{tpu_custom_call.1} parent=1 // pred_fallthru
      _
    // Predicated region
    $region74: #{tpu_custom_call.1} parent=1 // pred_check
      _
    $region75: #{tpu_custom_call.1} parent=1 // pred_check_branch
      %794 = sbr.rel (0) target = $region77
    $region76: #{tpu_custom_call.1} parent=1 // pred_region
      %796 = dma.done [#allocation16], 1024
    $region77: #{tpu_custom_call.1} parent=1 // pred_fallthru
      _
    %797 = vsyncpa [#allocation4], 1
    %798 = vsyncpa [#allocation7], 1
    %799 = vsyncpa [#allocation10], 1
    %800 = vsyncpa [#allocation13], 1
    %801 = vsyncpa [#allocation5], 1
    %802 = vsyncpa [#allocation16], 1

</llo_original>
